<compile_context>
chip_gen: v5e
topology: v5e:2x2
jax: 0.10.0
libtpu: 0.0.40
codegen_flags: <defaults>
</compile_context>

<pallas_src>
import functools

import numpy as np
import jax
import jax.numpy as jnp
from jax.experimental import pallas as pl
from jax.experimental.pallas import tpu as pltpu


def _round_up(x, m):
    return ((x + m - 1) // m) * m


# ----------------------------------------------------------------------------
# Kernel: grid = (N*3 anchors, chunks, lane-tiles). Streams per step:
#   pred (D, TL), label (D, TL), masks (3, TL)  ->  ONE (D, TL) accumulator.
# ----------------------------------------------------------------------------
def _yolo_loss_kernel(pred_ref, lab_ref, mask_ref, out_ref, acc_ref):
    j = pl.program_id(2)

    @pl.when(j == 0)
    def _():
        acc_ref[...] = jnp.zeros_like(acc_ref)

    x = pred_ref[0].astype(jnp.float32)          # (D, TL) raw logits
    y = lab_ref[0].astype(jnp.float32)           # (D, TL) labels
    m = mask_ref[0]                              # (3, TL): conf, cls, lambda_pos

    d = jax.lax.broadcasted_iota(jnp.int32, x.shape, 0)

    # BCE with logits == torch Sigmoid + BCELoss(reduction='none') with the
    # -100 log clamp:  -log(sigmoid(x)) = softplus(-x),
    #                  -log(1 - sigmoid(x)) = softplus(x)
    e = jnp.exp(-jnp.abs(x))                     # one shared EUP exp
    log_term = jnp.log(1.0 + e)
    sp_pos = jnp.maximum(x, 0.0) + log_term      # softplus(x)
    sp_neg = sp_pos - x                          # softplus(-x)
    bce = (y * jnp.minimum(sp_neg, 100.0)
           + (1.0 - y) * jnp.minimum(sp_pos, 100.0))

    # MSE term on per-anchor channels 0..3 (0,1 use sigmoid; 2,3 raw).
    inv = 1.0 / (1.0 + e)
    sig = jnp.where(x >= 0.0, inv, 1.0 - inv)
    xs = jnp.where(d < 2, sig, x)
    diff = xs - y

    # Per-element weight from the 3-row mask slab (sublane broadcasts).
    conf_w = jnp.broadcast_to(m[0:1, :], x.shape)
    cls_w = jnp.broadcast_to(m[1:2, :], x.shape)
    lam_w = jnp.broadcast_to(m[2:3, :], x.shape)
    is_pos = d < 4
    w = jnp.where(is_pos, lam_w, jnp.where(d == 4, conf_w, cls_w))
    term = jnp.where(is_pos, diff * diff, bce)
    acc_ref[...] += term * w                     # single VMEM RMW per element

    @pl.when(j == pl.num_programs(2) - 1)
    def _():
        a = acc_ref[...]
        d2 = jax.lax.broadcasted_iota(jnp.int32, a.shape, 0)
        conf = jnp.sum(jnp.where(d2 == 4, a, 0.0))
        cls_ = jnp.sum(jnp.where(d2 >= 5, a, 0.0))
        pos = jnp.sum(jnp.where(d2 < 4, a, 0.0))
        sub = jax.lax.broadcasted_iota(jnp.int32, (8, 128), 0)
        lane = jax.lax.broadcasted_iota(jnp.int32, (8, 128), 1)
        row0 = sub == 0
        vec = (jnp.where(row0 & (lane == 0), conf, 0.0)
               + jnp.where(row0 & (lane == 1), cls_, 0.0)
               + jnp.where(row0 & (lane == 2), pos, 0.0))
        out_ref[...] = vec.reshape(1, 1, 8, 128)


# ----------------------------------------------------------------------------
# Per-scale pallas_call wrapper (lane tiling + padding + grid setup)
# ----------------------------------------------------------------------------
def _scale_partial_loss(pred, lab, masks, lane_tile, num_chunks):
    NG, D, L = pred.shape

    # Lane tiling: widest tile <= lane_tile while keeping padded total minimal
    # (fixes the old "L=84 padded to 1024" blow-up).
    t128 = pl.cdiv(L, 128)
    max_per = max(1, lane_tile // 128)
    s_min = pl.cdiv(t128, max_per)
    best = None
    for s in range(s_min, min(s_min + 4, t128) + 1):
        per = pl.cdiv(t128, s)
        padded = s * per
        if best is None or padded < best[0]:
            best = (padded, s, per)
    _, steps, per = best
    tl = per * 128

    nchunks = max(1, min(num_chunks, steps))
    steps = _round_up(steps, nchunks)
    tpc = steps // nchunks
    l_pad = steps * tl
    pad = l_pad - L
    if pad:
        cfg = ((0, 0), (0, 0), (0, pad))
        pred = jnp.pad(pred, cfg)
        lab = jnp.pad(lab, cfg)
        masks = jnp.pad(masks, cfg)   # zero mask pads -> padded lanes contribute 0

    data_spec = pl.BlockSpec((1, D, tl), lambda g, i, j: (g, 0, i * tpc + j))
    mask_spec = pl.BlockSpec((1, 3, tl), lambda g, i, j: (g, 0, i * tpc + j))

    partials = pl.pallas_call(
        _yolo_loss_kernel,
        out_shape=jax.ShapeDtypeStruct((NG, nchunks, 8, 128), jnp.float32),
        grid_spec=pltpu.PrefetchScalarGridSpec(
            num_scalar_prefetch=0,
            grid=(NG, nchunks, tpc),
            in_specs=[data_spec, data_spec, mask_spec],
            out_specs=pl.BlockSpec((1, 1, 8, 128), lambda g, i, j: (g, i, 0, 0)),
            scratch_shapes=[pltpu.VMEM((D, tl), jnp.float32)],
        ),
        compiler_params=pltpu.CompilerParams(
            dimension_semantics=("parallel", "parallel", "arbitrary"),
            vmem_limit_bytes=48 * 1024 * 1024,   # safe on v7x (64 MiB phys), above v5e default
        ),
    )(pred, lab, masks)

    conf = jnp.sum(partials[:, :, 0, 0])
    cls_ = jnp.sum(partials[:, :, 0, 1])
    pos = jnp.sum(partials[:, :, 0, 2])
    return conf, cls_, pos


# ----------------------------------------------------------------------------
# Mask construction: vectorized scatter (XLA glue, O(N*3*HW + T))
# ----------------------------------------------------------------------------
def _build_masks(tag, label_data, anchors_m, H, W):
    """Dense per-cell masks in (N, 3_anchors, H*W) layout.

    Replicates the reference python loops: 'break' at the first -1 tag entry
    (via cumprod) and last-write-wins for lambda_pos (via scatter-max over the
    tag index, then gather).
    """
    # TODO(synk): the original loop is data-dependent python with .item(); the
    # scatter-style mask construction stays as JAX glue outside the kernel.
    N, T, _ = tag.shape
    HW = H * W
    r = tag[:, :, 0]
    c = tag[:, :, 1]
    b = tag[:, :, 2]
    t = tag[:, :, 3]
    valid = jnp.cumprod((r != -1).astype(jnp.int32), axis=1) > 0   # break at -1
    rs = jnp.clip(r, 0, H - 1)
    cs = jnp.clip(c, 0, W - 1)
    bs = jnp.clip(b, 0, 2)
    cell = rs * W + cs                                             # (N, T)
    n_idx = jnp.broadcast_to(jnp.arange(N)[:, None], (N, T))

    # Confidence mask: ones, zeroed wherever a valid tag with t==1 hits.
    hit1 = (valid & (t == 1)).astype(jnp.float32)
    conf_hit = jnp.zeros((N, 3, HW), jnp.float32).at[n_idx, bs, cell].max(hit1)
    conf_mask = 1.0 - conf_hit

    # Class mask: zeros, set to 1 wherever a valid tag with t==2 hits.
    hit2 = (valid & (t == 2)).astype(jnp.float32)
    cls_mask = jnp.zeros((N, 3, HW), jnp.float32).at[n_idx, bs, cell].max(hit2)

    # Position lambda: last-write-wins among valid t==2 tags hitting a cell.
    order = jnp.broadcast_to(jnp.arange(T)[None, :], (N, T))
    upd = jnp.where(valid & (t == 2), order, -1)
    winner = jnp.full((N, 3, HW), -1, jnp.int32).at[n_idx, bs, cell].max(upd)

    batch_idx = jnp.arange(N)[:, None]
    lw = label_data[batch_idx, rs, cs, bs, 2]                      # (N, T)
    lh = label_data[batch_idx, rs, cs, bs, 3]
    lam = 2.0 - anchors_m[bs, 0] * jnp.exp(lw) * (anchors_m[bs, 1] * jnp.exp(lh))

    wflat = winner.reshape(N, 3 * HW)
    lam_g = jnp.take_along_axis(lam, jnp.clip(wflat, 0, T - 1), axis=1)
    pos_lambda = jnp.where(winner >= 0, lam_g.reshape(N, 3, HW), 0.0)
    return conf_mask, cls_mask, pos_lambda


# ----------------------------------------------------------------------------
# Wrapper (matches YOLOv3Loss.forward: returns (total, conf, class, position))
# ----------------------------------------------------------------------------
def yolov3_loss(outputs, labels, anchor_box, loss_scale=1.0,
                lane_tile=2048, num_chunks=1):
    assert lane_tile % 128 == 0
    label_data = labels[0:3]
    label_tag = labels[3:6]

    batch_conf = jnp.float32(0.0)
    batch_cls = jnp.float32(0.0)
    batch_pos = jnp.float32(0.0)
    for m in range(3):
        out = outputs[m]                          # (N, 3*D, H, W), native NCHW
        N, C, H, W = out.shape
        D = C // 3
        HW = H * W
        # Free (contiguous) view: anchor-major channels -> (N*3, D, HW)
        pred = out.reshape(N * 3, D, HW)
        ld = label_data[m].astype(jnp.float32)    # (N, H, W, 3, D)
        lab = jnp.transpose(ld, (0, 3, 4, 1, 2)).reshape(N * 3, D, HW)
        conf_m, cls_m, lam_m = _build_masks(label_tag[m], ld, anchor_box[m], H, W)
        masks = jnp.stack([conf_m, cls_m, lam_m], axis=2).reshape(N * 3, 3, HW)
        c_s, k_s, p_s = _scale_partial_loss(pred, lab, masks, lane_tile, num_chunks)
        batch_conf += c_s
        batch_cls += k_s
        batch_pos += p_s

    n_batch = jnp.float32(label_tag[0].shape[0])
    scale = jnp.float32(loss_scale)
    avg_conf = (batch_conf / n_batch) * scale
    avg_cls = (batch_cls / n_batch) * scale
    avg_pos = (batch_pos / n_batch) * scale
    total = avg_conf + avg_cls + avg_pos
    return total, avg_conf, avg_cls, avg_pos


# ----------------------------------------------------------------------------
# Pure-JAX reference mirroring the torch semantics (independent, loop-based
# mask construction so it also cross-checks the scatter version above).
# ----------------------------------------------------------------------------
def _ref_build_masks(tag, label_data, anchors_m, H, W):
    N, T, _ = tag.shape
    HW = H * W
    conf_mask = jnp.ones((N, 3, HW), jnp.float32)
    cls_mask = jnp.zeros((N, 3, HW), jnp.float32)
    pos_lambda = jnp.zeros((N, 3, HW), jnp.float32)
    valid = jnp.cumprod((tag[:, :, 0] != -1).astype(jnp.int32), axis=1) > 0
    hw_idx = jnp.arange(HW)[None, None, :]
    b_idx = jnp.arange(3)[None, :, None]
    batch_idx = jnp.arange(N)
    for i in range(T):
        r = tag[:, i, 0]; c = tag[:, i, 1]; b = tag[:, i, 2]; t = tag[:, i, 3]
        v = valid[:, i]
        rs = jnp.clip(r, 0, H - 1); cs = jnp.clip(c, 0, W - 1); bs = jnp.clip(b, 0, 2)
        cell = rs * W + cs
        hit = ((hw_idx == cell[:, None, None]) &
               (b_idx == bs[:, None, None]) & v[:, None, None])
        conf_mask = jnp.where(hit & (t == 1)[:, None, None], 0.0, conf_mask)
        is2 = hit & (t == 2)[:, None, None]
        cls_mask = jnp.where(is2, 1.0, cls_mask)
        lw = label_data[batch_idx, rs, cs, bs, 2]
        lh = label_data[batch_idx, rs, cs, bs, 3]
        lam = 2.0 - anchors_m[bs, 0] * jnp.exp(lw) * (anchors_m[bs, 1] * jnp.exp(lh))
        pos_lambda = jnp.where(is2, lam[:, None, None], pos_lambda)
    return conf_mask, cls_mask, pos_lambda


def _ref_loss(outputs, labels, anchor_box, loss_scale=1.0):
    label_data = labels[0:3]
    label_tag = labels[3:6]
    bc = bk = bp = jnp.float32(0.0)
    for m in range(3):
        out = outputs[m]
        N, C, H, W = out.shape
        D = C // 3
        x = jnp.transpose(out, (0, 2, 3, 1)).reshape(N, H, W, 3, D).astype(jnp.float32)
        y = label_data[m].astype(jnp.float32)
        cm, km, pm = _ref_build_masks(label_tag[m], y, anchor_box[m], H, W)
        cm = cm.reshape(N, 3, H, W).transpose(0, 2, 3, 1)
        km = km.reshape(N, 3, H, W).transpose(0, 2, 3, 1)
        pm = pm.reshape(N, 3, H, W).transpose(0, 2, 3, 1)
        ch = jnp.arange(D)
        sig_sel = (ch < 2) | (ch >= 4)
        xs = jnp.where(sig_sel, jax.nn.sigmoid(x), x)
        safe = jnp.where(sig_sel, xs, 0.5)
        bce = -(y * jnp.maximum(jnp.log(safe), -100.0)
                + (1.0 - y) * jnp.maximum(jnp.log(1.0 - safe), -100.0))
        bc = bc + jnp.sum(bce[..., 4] * cm)
        bk = bk + jnp.sum(bce[..., 5:] * km[..., None])
        bp = bp + jnp.sum(((xs - y) ** 2)[..., 0:4] * pm[..., None])
    n = jnp.float32(label_tag[0].shape[0])
    s = jnp.float32(loss_scale)
    ac, ak, ap = bc / n * s, bk / n * s, bp / n * s
    return ac + ak + ap, ac, ak, ap


if __name__ == "__main__":
    key = jax.random.PRNGKey(0)
    N = 2
    num_classes = 3
    D = 5 + num_classes            # 8 per-anchor channels
    C = 3 * D                      # 24
    sizes = [8, 4, 2]              # H = W per scale
    T = 4                          # max objects per image

    ks = jax.random.split(key, 8)
    outputs = [
        0.5 * jax.random.normal(ks[m], (N, C, sizes[m], sizes[m]), jnp.float32)
        for m in range(3)
    ]
    label_data = [
        jax.random.uniform(ks[3 + m], (N, sizes[m], sizes[m], 3, D), jnp.float32)
        for m in range(3)
    ]

    tag_A = jnp.array(
        [[[1, 2, 0, 2], [3, 4, 1, 1], [5, 6, 2, 2], [-1, -1, -1, -1]],
         [[0, 0, 0, 2], [-1, -1, -1, -1], [7, 7, 2, 2], [2, 3, 1, 1]]],
        dtype=jnp.int32)
    tag_B = jnp.array(
        [[[0, 1, 0, 2], [3, 3, 2, 1], [-1, -1, -1, -1], [-1, -1, -1, -1]],
         [[2, 2, 1, 2], [1, 0, 0, 2], [3, 1, 2, 1], [-1, -1, -1, -1]]],
        dtype=jnp.int32)
    tag_C = jnp.array(
        [[[0, 1, 2, 2], [-1, -1, -1, -1], [-1, -1, -1, -1], [-1, -1, -1, -1]],
         [[1, 1, 0, 1], [0, 0, 1, 2], [-1, -1, -1, -1], [-1, -1, -1, -1]]],
        dtype=jnp.int32)

    labels = label_data + [tag_A, tag_B, tag_C]

    anchor_box = jnp.array(
        [[[0.10, 0.15], [0.20, 0.30], [0.40, 0.50]],
         [[0.25, 0.20], [0.35, 0.45], [0.55, 0.60]],
         [[0.50, 0.40], [0.70, 0.80], [0.90, 1.00]]],
        dtype=jnp.float32)

    loss_fn = jax.jit(lambda o, l, a: yolov3_loss(o, l, a, loss_scale=1.0))
    result = loss_fn(outputs, labels, anchor_box)
    result = jax.block_until_ready(result)

    ref = _ref_loss(outputs, labels, anchor_box, loss_scale=1.0)
    np.testing.assert_allclose(np.array(result), np.array(ref),
                               rtol=1e-4, atol=1e-4)

    print("KERNEL_OK")
</pallas_src>

<mosaic_0001>
module attributes {stable_mosaic.version = 11 : i64} {
  func.func @_yolo_loss_kernel(%arg0: i32, %arg1: i32, %arg2: i32, %arg3: memref<1x8x128xf32, #tpu.memory_space<vmem>>, %arg4: memref<1x8x128xf32, #tpu.memory_space<vmem>>, %arg5: memref<1x3x128xf32, #tpu.memory_space<vmem>>, %arg6: memref<1x1x8x128xf32, #tpu.memory_space<vmem>>, %arg7: memref<8x128xf32, #tpu.memory_space<vmem>>) attributes {dimension_semantics = [#tpu.dimension_semantics<parallel>, #tpu.dimension_semantics<parallel>, #tpu.dimension_semantics<arbitrary>], iteration_bounds = array<i64: 6, 1, 1>, scalar_prefetch = 0 : i64, scratch_operands = 1 : i64, tpu.core_type = #tpu.core_type<tc>, window_params = [{transform_indices = @transform_0, window_bounds = array<i64: 1, 8, 128>}, {transform_indices = @transform_1, window_bounds = array<i64: 1, 8, 128>}, {transform_indices = @transform_2, window_bounds = array<i64: 1, 3, 128>}, {transform_indices = @transform_3, window_bounds = array<i64: 1, 1, 8, 128>}]} {
    %c0_i32 = arith.constant 0 : i32
    %0 = arith.cmpi eq, %arg2, %c0_i32 : i32
    %1 = arith.extui %0 : i1 to i32
    %c0_i32_0 = arith.constant 0 : i32
    %2 = arith.cmpi ne, %1, %c0_i32_0 : i32
    scf.if %2 {
      %cst_25 = arith.constant 0.000000e+00 : f32
      %67 = vector.broadcast %cst_25 : f32 to vector<8x128xf32>
      %c0_26 = arith.constant 0 : index
      %c0_27 = arith.constant 0 : index
      %68 = vector.load %arg7[%c0_26, %c0_27] : memref<8x128xf32, #tpu.memory_space<vmem>>, vector<8x128xf32>
      tpu.vector_store %arg7[%c0_26, %c0_27], %67 {strides = array<i32>} : memref<8x128xf32, #tpu.memory_space<vmem>>, vector<8x128xf32>,
    } else {
    }
    %c0 = arith.constant 0 : index
    %c0_1 = arith.constant 0 : index
    %c0_2 = arith.constant 0 : index
    %3 = vector.load %arg3[%c0, %c0_1, %c0_2] : memref<1x8x128xf32, #tpu.memory_space<vmem>>, vector<1x8x128xf32>
    %4 = vector.shape_cast %3 : vector<1x8x128xf32> to vector<8x128xf32>
    %c0_3 = arith.constant 0 : index
    %c0_4 = arith.constant 0 : index
    %c0_5 = arith.constant 0 : index
    %5 = vector.load %arg4[%c0_3, %c0_4, %c0_5] : memref<1x8x128xf32, #tpu.memory_space<vmem>>, vector<1x8x128xf32>
    %6 = vector.shape_cast %5 : vector<1x8x128xf32> to vector<8x128xf32>
    %c0_6 = arith.constant 0 : index
    %c0_7 = arith.constant 0 : index
    %c0_8 = arith.constant 0 : index
    %7 = vector.load %arg5[%c0_6, %c0_7, %c0_8] : memref<1x3x128xf32, #tpu.memory_space<vmem>>, vector<1x3x128xf32>
    %8 = vector.shape_cast %7 : vector<1x3x128xf32> to vector<3x128xf32>
    %9 = tpu.iota {dimensions = array<i32: 0>} : vector<8x128xi32>
    %10 = math.absf %4 : vector<8x128xf32>
    %cst = arith.constant 0.000000e+00 : f32
    %11 = vector.broadcast %cst : f32 to vector<8x128xf32>
    %12 = arith.subf %11, %10 : vector<8x128xf32>
    %13 = math.exp %12 : vector<8x128xf32>
    %cst_9 = arith.constant 1.000000e+00 : f32
    %14 = vector.broadcast %cst_9 : f32 to vector<8x128xf32>
    %15 = arith.addf %14, %13 : vector<8x128xf32>
    %16 = math.log %15 : vector<8x128xf32>
    %cst_10 = arith.constant 0.000000e+00 : f32
    %17 = vector.broadcast %cst_10 : f32 to vector<8x128xf32>
    %18 = arith.maximumf %4, %17 : vector<8x128xf32>
    %19 = arith.addf %18, %16 : vector<8x128xf32>
    %20 = arith.subf %19, %4 : vector<8x128xf32>
    %cst_11 = arith.constant 1.000000e+02 : f32
    %21 = vector.broadcast %cst_11 : f32 to vector<8x128xf32>
    %22 = arith.minimumf %20, %21 : vector<8x128xf32>
    %23 = arith.mulf %6, %22 : vector<8x128xf32>
    %cst_12 = arith.constant 1.000000e+00 : f32
    %24 = vector.broadcast %cst_12 : f32 to vector<8x128xf32>
    %25 = arith.subf %24, %6 : vector<8x128xf32>
    %cst_13 = arith.constant 1.000000e+02 : f32
    %26 = vector.broadcast %cst_13 : f32 to vector<8x128xf32>
    %27 = arith.minimumf %19, %26 : vector<8x128xf32>
    %28 = arith.mulf %25, %27 : vector<8x128xf32>
    %29 = arith.addf %23, %28 : vector<8x128xf32>
    %cst_14 = arith.constant 1.000000e+00 : f32
    %30 = vector.broadcast %cst_14 : f32 to vector<8x128xf32>
    %31 = arith.addf %30, %13 : vector<8x128xf32>
    %cst_15 = arith.constant 1.000000e+00 : f32
    %32 = vector.broadcast %cst_15 : f32 to vector<8x128xf32>
    %33 = arith.divf %32, %31 : vector<8x128xf32>
    %cst_16 = arith.constant 0.000000e+00 : f32
    %34 = vector.broadcast %cst_16 : f32 to vector<8x128xf32>
    %35 = arith.cmpf oge, %4, %34 : vector<8x128xf32>
    %cst_17 = arith.constant 1.000000e+00 : f32
    %36 = vector.broadcast %cst_17 : f32 to vector<8x128xf32>
    %37 = arith.subf %36, %33 : vector<8x128xf32>
    %38 = arith.select %35, %33, %37 : vector<8x128xi1>, vector<8x128xf32>
    %c2_i32 = arith.constant 2 : i32
    %39 = vector.broadcast %c2_i32 : i32 to vector<8x128xi32>
    %40 = arith.cmpi slt, %9, %39 : vector<8x128xi32>
    %41 = arith.select %40, %38, %4 : vector<8x128xi1>, vector<8x128xf32>
    %42 = arith.subf %41, %6 : vector<8x128xf32>
    %43 = vector.extract_strided_slice %8 {offsets = [0, 0], sizes = [1, 128], strides = [1, 1]} : vector<3x128xf32> to vector<1x128xf32>
    %44 = vector.shape_cast %43 : vector<1x128xf32> to vector<1x128xf32>
    %45 = vector.broadcast %44 : vector<1x128xf32> to vector<8x128xf32>
    %46 = vector.extract_strided_slice %8 {offsets = [1, 0], sizes = [1, 128], strides = [1, 1]} : vector<3x128xf32> to vector<1x128xf32>
    %47 = vector.shape_cast %46 : vector<1x128xf32> to vector<1x128xf32>
    %48 = vector.broadcast %47 : vector<1x128xf32> to vector<8x128xf32>
    %49 = vector.extract_strided_slice %8 {offsets = [2, 0], sizes = [1, 128], strides = [1, 1]} : vector<3x128xf32> to vector<1x128xf32>
    %50 = vector.shape_cast %49 : vector<1x128xf32> to vector<1x128xf32>
    %51 = vector.broadcast %50 : vector<1x128xf32> to vector<8x128xf32>
    %c4_i32 = arith.constant 4 : i32
    %52 = vector.broadcast %c4_i32 : i32 to vector<8x128xi32>
    %53 = arith.cmpi slt, %9, %52 : vector<8x128xi32>
    %c4_i32_18 = arith.constant 4 : i32
    %54 = vector.broadcast %c4_i32_18 : i32 to vector<8x128xi32>
    %55 = arith.cmpi eq, %9, %54 : vector<8x128xi32>
    %56 = arith.select %55, %45, %48 : vector<8x128xi1>, vector<8x128xf32>
    %57 = arith.select %53, %51, %56 : vector<8x128xi1>, vector<8x128xf32>
    %58 = arith.mulf %42, %42 : vector<8x128xf32>
    %59 = arith.select %53, %58, %29 : vector<8x128xi1>, vector<8x128xf32>
    %c0_19 = arith.constant 0 : index
    %c0_20 = arith.constant 0 : index
    %60 = vector.load %arg7[%c0_19, %c0_20] : memref<8x128xf32, #tpu.memory_space<vmem>>, vector<8x128xf32>
    %61 = arith.mulf %59, %57 : vector<8x128xf32>
    %62 = arith.addf %60, %61 : vector<8x128xf32>
    %c0_21 = arith.constant 0 : index
    %c0_22 = arith.constant 0 : index
    %63 = vector.load %arg7[%c0_21, %c0_22] : memref<8x128xf32, #tpu.memory_space<vmem>>, vector<8x128xf32>
    tpu.vector_store %arg7[%c0_21, %c0_22], %62 {strides = array<i32>} : memref<8x128xf32, #tpu.memory_space<vmem>>, vector<8x128xf32>,
    %c0_i32_23 = arith.constant 0 : i32
    %64 = arith.cmpi eq, %arg2, %c0_i32_23 : i32
    %65 = arith.extui %64 : i1 to i32
    %c0_i32_24 = arith.constant 0 : i32
    %66 = arith.cmpi ne, %65, %c0_i32_24 : i32
    scf.if %66 {
      %c0_25 = arith.constant 0 : index
      %c0_26 = arith.constant 0 : index
      %67 = vector.load %arg7[%c0_25, %c0_26] : memref<8x128xf32, #tpu.memory_space<vmem>>, vector<8x128xf32>
      %68 = tpu.iota {dimensions = array<i32: 0>} : vector<8x128xi32>
      %c4_i32_27 = arith.constant 4 : i32
      %69 = vector.broadcast %c4_i32_27 : i32 to vector<8x128xi32>
      %70 = arith.cmpi eq, %68, %69 : vector<8x128xi32>
      %cst_28 = arith.constant 0.000000e+00 : f32
      %71 = vector.broadcast %cst_28 : f32 to vector<8x128xf32>
      %72 = arith.select %70, %67, %71 : vector<8x128xi1>, vector<8x128xf32>
      %73 = vector.shape_cast %72 : vector<8x128xf32> to vector<1x8x128xf32>
      %cst_29 = arith.constant dense<0.000000e+00> : vector<1xf32>
      %74 = vector.multi_reduction <add>, %73, %cst_29 [1, 2] : vector<1x8x128xf32> to vector<1xf32>
      %75 = vector.shape_cast %74 : vector<1xf32> to vector<1x1x1xf32>
      %76 = vector.extract %75[0, 0, 0] : f32 from vector<1x1x1xf32>
      %c5_i32 = arith.constant 5 : i32
      %77 = vector.broadcast %c5_i32 : i32 to vector<8x128xi32>
      %78 = arith.cmpi sge, %68, %77 : vector<8x128xi32>
      %cst_30 = arith.constant 0.000000e+00 : f32
      %79 = vector.broadcast %cst_30 : f32 to vector<8x128xf32>
      %80 = arith.select %78, %67, %79 : vector<8x128xi1>, vector<8x128xf32>
      %81 = vector.shape_cast %80 : vector<8x128xf32> to vector<1x8x128xf32>
      %cst_31 = arith.constant dense<0.000000e+00> : vector<1xf32>
      %82 = vector.multi_reduction <add>, %81, %cst_31 [1, 2] : vector<1x8x128xf32> to vector<1xf32>
      %83 = vector.shape_cast %82 : vector<1xf32> to vector<1x1x1xf32>
      %84 = vector.extract %83[0, 0, 0] : f32 from vector<1x1x1xf32>
      %c4_i32_32 = arith.constant 4 : i32
      %85 = vector.broadcast %c4_i32_32 : i32 to vector<8x128xi32>
      %86 = arith.cmpi slt, %68, %85 : vector<8x128xi32>
      %cst_33 = arith.constant 0.000000e+00 : f32
      %87 = vector.broadcast %cst_33 : f32 to vector<8x128xf32>
      %88 = arith.select %86, %67, %87 : vector<8x128xi1>, vector<8x128xf32>
      %89 = vector.shape_cast %88 : vector<8x128xf32> to vector<1x8x128xf32>
      %cst_34 = arith.constant dense<0.000000e+00> : vector<1xf32>
      %90 = vector.multi_reduction <add>, %89, %cst_34 [1, 2] : vector<1x8x128xf32> to vector<1xf32>
      %91 = vector.shape_cast %90 : vector<1xf32> to vector<1x1x1xf32>
      %92 = vector.extract %91[0, 0, 0] : f32 from vector<1x1x1xf32>
      %93 = tpu.iota {dimensions = array<i32: 0>} : vector<8x128xi32>
      %94 = tpu.iota {dimensions = array<i32: 1>} : vector<8x128xi32>
      %c0_i32_35 = arith.constant 0 : i32
      %95 = vector.broadcast %c0_i32_35 : i32 to vector<8x128xi32>
      %96 = arith.cmpi eq, %93, %95 : vector<8x128xi32>
      %c0_i32_36 = arith.constant 0 : i32
      %97 = vector.broadcast %c0_i32_36 : i32 to vector<8x128xi32>
      %98 = arith.cmpi eq, %94, %97 : vector<8x128xi32>
      %99 = arith.andi %96, %98 : vector<8x128xi1>
      %cst_37 = arith.constant 0.000000e+00 : f32
      %100 = vector.broadcast %76 : f32 to vector<8x128xf32>
      %101 = vector.broadcast %cst_37 : f32 to vector<8x128xf32>
      %102 = arith.select %99, %100, %101 : vector<8x128xi1>, vector<8x128xf32>
      %c1_i32 = arith.constant 1 : i32
      %103 = vector.broadcast %c1_i32 : i32 to vector<8x128xi32>
      %104 = arith.cmpi eq, %94, %103 : vector<8x128xi32>
      %105 = arith.andi %96, %104 : vector<8x128xi1>
      %cst_38 = arith.constant 0.000000e+00 : f32
      %106 = vector.broadcast %84 : f32 to vector<8x128xf32>
      %107 = vector.broadcast %cst_38 : f32 to vector<8x128xf32>
      %108 = arith.select %105, %106, %107 : vector<8x128xi1>, vector<8x128xf32>
      %109 = arith.addf %102, %108 : vector<8x128xf32>
      %c2_i32_39 = arith.constant 2 : i32
      %110 = vector.broadcast %c2_i32_39 : i32 to vector<8x128xi32>
      %111 = arith.cmpi eq, %94, %110 : vector<8x128xi32>
      %112 = arith.andi %96, %111 : vector<8x128xi1>
      %cst_40 = arith.constant 0.000000e+00 : f32
      %113 = vector.broadcast %92 : f32 to vector<8x128xf32>
      %114 = vector.broadcast %cst_40 : f32 to vector<8x128xf32>
      %115 = arith.select %112, %113, %114 : vector<8x128xi1>, vector<8x128xf32>
      %116 = arith.addf %109, %115 : vector<8x128xf32>
      %117 = vector.shape_cast %116 : vector<8x128xf32> to vector<1x1x8x128xf32>
      %c0_41 = arith.constant 0 : index
      %c0_42 = arith.constant 0 : index
      %c0_43 = arith.constant 0 : index
      %c0_44 = arith.constant 0 : index
      %118 = vector.load %arg6[%c0_41, %c0_42, %c0_43, %c0_44] : memref<1x1x8x128xf32, #tpu.memory_space<vmem>>, vector<1x1x8x128xf32>
      tpu.vector_store %arg6[%c0_41, %c0_42, %c0_43, %c0_44], %117 {strides = array<i32>} : memref<1x1x8x128xf32, #tpu.memory_space<vmem>>, vector<1x1x8x128xf32>,
    } else {
    }
    return
  }
  func.func @transform_0(%arg0: i32, %arg1: i32, %arg2: i32) -> (i32, i32, i32) {
    %c1_i32 = arith.constant 1 : i32
    %0 = arith.muli %arg1, %c1_i32 : i32
    %1 = arith.addi %0, %arg2 : i32
    %c0_i32 = arith.constant 0 : i32
    %c0_i32_0 = arith.constant 0 : i32
    return %arg0, %c0_i32, %1 : i32, i32, i32
  }
  func.func @transform_1(%arg0: i32, %arg1: i32, %arg2: i32) -> (i32, i32, i32) {
    %c1_i32 = arith.constant 1 : i32
    %0 = arith.muli %arg1, %c1_i32 : i32
    %1 = arith.addi %0, %arg2 : i32
    %c0_i32 = arith.constant 0 : i32
    %c0_i32_0 = arith.constant 0 : i32
    return %arg0, %c0_i32, %1 : i32, i32, i32
  }
  func.func @transform_2(%arg0: i32, %arg1: i32, %arg2: i32) -> (i32, i32, i32) {
    %c1_i32 = arith.constant 1 : i32
    %0 = arith.muli %arg1, %c1_i32 : i32
    %1 = arith.addi %0, %arg2 : i32
    %c0_i32 = arith.constant 0 : i32
    %c0_i32_0 = arith.constant 0 : i32
    return %arg0, %c0_i32, %1 : i32, i32, i32
  }
  func.func @transform_3(%arg0: i32, %arg1: i32, %arg2: i32) -> (i32, i32, i32, i32) {
    %c0_i32 = arith.constant 0 : i32
    %c0_i32_0 = arith.constant 0 : i32
    %c0_i32_1 = arith.constant 0 : i32
    return %arg0, %arg1, %c0_i32, %c0_i32_0 : i32, i32, i32, i32
  }
}

</mosaic_0001>

<llo_original>
// kernel: _lambda_.3
$region0: #{_lambda_.3}
  #allocation0 [shape = 'u32[]', space=smem, size = 0x4, offset = 0x4, fixed_abs, tag = 'smem constant byte address 0x4 - core index']
  #allocation1 [shape = 'u32[72,128]{1,0:T(1,128)}', space=vmem, size = 0x9000, scoped, tag = 'internal scratch']
  #allocation2 [shape = 'f32[8,128]{1,0:T(8,128)}', space=vmem, size = 0x1000, scoped, tag = 'scratch operand']
  %s0 = inlined_call_operand.vmem [shape: f32[6,8,128], index: 0, kind: input, shape index: {}]
  %s1 = inlined_call_operand.vmem [shape: f32[6,8,128], index: 1, kind: input, shape index: {}]
  %s2 = inlined_call_operand.vmem [shape: f32[6,3,128], index: 2, kind: input, shape index: {}]
  %s3 = inlined_call_operand.vmem [shape: f32[6,1,8,128], index: 3, kind: output, shape index: {}]
  %s4 = sld [smem:[#allocation0]]
  $region53: #{_lambda_.3} parent=0
    _
  %s6 = ssub.s32 1, %s4
  %s7 = scalar_select 0, %s6, %s4
  loop: start=0, step=1, limit=8
  $region2: #{_lambda_.3} parent=0 // loop_pre_header
    _
  $region3: #{_lambda_.3} parent=0 // loop_header
    %s9 = sphi 0, %s13
    %p10 = scmp.ge.s32.totalorder %s9, 8
    %s16 = sphi 0, %s35
    %s17 = sphi 0, %s31
    %s18 = sphi 0, %s27
    %s19 = sphi 0, %s16
    %s20 = sphi 0, %s17
    %s21 = sphi 0, %s18
    %s22 = sphi 0, %s19
    %s23 = sphi 0, %s20
    %s24 = sphi 0, %s21
    %s42 = sphi 0, %s44
    %s45 = sphi 0, %s42
    %s46 = sphi 0, %s45
    %s62 = sphi 0, %s46
    %s72 = sphi 0, %s74
    %s75 = sphi 0, %s72
    %s76 = sphi 0, %s75
    %s92 = sphi 0, %s76
    %s102 = sphi 0, %s104
    %s105 = sphi 0, %s102
    %s106 = sphi 0, %s105
    %s122 = sphi 0, %s106
    %s130 = sphi 0, %s132
    %s133 = sphi 0, %s130
    %s134 = sphi 0, %s133
    %s150 = sphi 0, %s134
  $region4: #{_lambda_.3} parent=0 // loop_header_branch
    %12 = sbr.rel (%p10) target = $region8
  $region5: #{_lambda_.3} parent=0 // loop_body
    %s14 = ssub.s32 %s9, 1
    %s15 = ssub.s32 %s9, 2
    %s25 = sadd.s32 1, %s18
    %p26 = scmp.ge.s32.totalorder %s25, 1
    %s27 = scalar_select %p26, 0, %s25
    %s28 = sadd.s32 1, %s17
    %s29 = scalar_select %p26, %s28, %s17
    %p30 = scmp.ge.s32.totalorder %s29, 1
    %s31 = scalar_select %p30, 0, %s29
    %s32 = sadd.s32 1, %s16
    %s33 = scalar_select %p30, %s32, %s16
    %p34 = scmp.ge.s32.totalorder %s33, 6
    %s35 = scalar_select %p34, 0, %s33
    %s36 = sadd.s32 %s17, %s18
    %s37 = sadd.s32 %s31, %s27
    %s38 = ssub.s32 %s16, %s35
    %s39 = ssub.s32 %s36, %s37
    %s40 = sor.u32 %s38, %s39
    %p41 = scmp.eq.s32.totalorder %s40, 0
    %s43 = sadd.s32 %s42, 1
    %s44 = scalar_select %p41, %s42, %s43
    %p47 = pneg %p41
    %p48 = scmp.eq.s32.totalorder %s9, 5
    %p49 = por %p47, %p48
    %p50 = scmp.ne.s32.totalorder %s42, %s45
    %p51 = scmp.eq.s32.totalorder %s9, 0
    %p52 = por %p50, %p51
    %p53 = scmp.ne.s32.totalorder %s42, %s45
    %p54 = scmp.eq.s32.totalorder %s14, 5
    %p55 = por %p53, %p54
    %p56 = scmp.ne.s32.totalorder %s45, %s46
    %p57 = scmp.eq.s32.totalorder %s14, 0
    %p58 = por %p56, %p57
    %p59 = scmp.ne.s32.totalorder %s45, %s46
    %p60 = scmp.eq.s32.totalorder %s15, 5
    %p61 = por %p59, %p60
    %p63 = scmp.ne.s32.totalorder %s46, %s62
    %p64 = scmp.eq.s32.totalorder %s15, 0
    %p65 = por %p63, %p64
    %s66 = sadd.s32 %s17, %s18
    %s67 = sadd.s32 %s31, %s27
    %s68 = ssub.s32 %s16, %s35
    %s69 = ssub.s32 %s66, %s67
    %s70 = sor.u32 %s68, %s69
    %p71 = scmp.eq.s32.totalorder %s70, 0
    %s73 = sadd.s32 %s72, 1
    %s74 = scalar_select %p71, %s72, %s73
    %p77 = pneg %p71
    %p78 = scmp.eq.s32.totalorder %s9, 5
    %p79 = por %p77, %p78
    %p80 = scmp.ne.s32.totalorder %s72, %s75
    %p81 = scmp.eq.s32.totalorder %s9, 0
    %p82 = por %p80, %p81
    %p83 = scmp.ne.s32.totalorder %s72, %s75
    %p84 = scmp.eq.s32.totalorder %s14, 5
    %p85 = por %p83, %p84
    %p86 = scmp.ne.s32.totalorder %s75, %s76
    %p87 = scmp.eq.s32.totalorder %s14, 0
    %p88 = por %p86, %p87
    %p89 = scmp.ne.s32.totalorder %s75, %s76
    %p90 = scmp.eq.s32.totalorder %s15, 5
    %p91 = por %p89, %p90
    %p93 = scmp.ne.s32.totalorder %s76, %s92
    %p94 = scmp.eq.s32.totalorder %s15, 0
    %p95 = por %p93, %p94
    %s96 = sadd.s32 %s17, %s18
    %s97 = sadd.s32 %s31, %s27
    %s98 = ssub.s32 %s16, %s35
    %s99 = ssub.s32 %s96, %s97
    %s100 = sor.u32 %s98, %s99
    %p101 = scmp.eq.s32.totalorder %s100, 0
    %s103 = sadd.s32 %s102, 1
    %s104 = scalar_select %p101, %s102, %s103
    %p107 = pneg %p101
    %p108 = scmp.eq.s32.totalorder %s9, 5
    %p109 = por %p107, %p108
    %p110 = scmp.ne.s32.totalorder %s102, %s105
    %p111 = scmp.eq.s32.totalorder %s9, 0
    %p112 = por %p110, %p111
    %p113 = scmp.ne.s32.totalorder %s102, %s105
    %p114 = scmp.eq.s32.totalorder %s14, 5
    %p115 = por %p113, %p114
    %p116 = scmp.ne.s32.totalorder %s105, %s106
    %p117 = scmp.eq.s32.totalorder %s14, 0
    %p118 = por %p116, %p117
    %p119 = scmp.ne.s32.totalorder %s105, %s106
    %p120 = scmp.eq.s32.totalorder %s15, 5
    %p121 = por %p119, %p120
    %p123 = scmp.ne.s32.totalorder %s106, %s122
    %p124 = scmp.eq.s32.totalorder %s15, 0
    %p125 = por %p123, %p124
    %s126 = ssub.s32 %s16, %s35
    %s127 = ssub.s32 %s17, %s31
    %s128 = sor.u32 %s126, %s127
    %p129 = scmp.eq.s32.totalorder %s128, 0
    %s131 = sadd.s32 %s130, 1
    %s132 = scalar_select %p129, %s130, %s131
    %p135 = pneg %p129
    %p136 = scmp.eq.s32.totalorder %s9, 5
    %p137 = por %p135, %p136
    %p138 = scmp.ne.s32.totalorder %s130, %s133
    %p139 = scmp.eq.s32.totalorder %s9, 0
    %p140 = por %p138, %p139
    %p141 = scmp.ne.s32.totalorder %s130, %s133
    %p142 = scmp.eq.s32.totalorder %s14, 5
    %p143 = por %p141, %p142
    %p144 = scmp.ne.s32.totalorder %s133, %s134
    %p145 = scmp.eq.s32.totalorder %s14, 0
    %p146 = por %p144, %p145
    %p147 = scmp.ne.s32.totalorder %s133, %s134
    %p148 = scmp.eq.s32.totalorder %s15, 5
    %p149 = por %p147, %p148
    %p151 = scmp.ne.s32.totalorder %s134, %s150
    %p152 = scmp.eq.s32.totalorder %s15, 0
    %p153 = por %p151, %p152
    %p154 = scmp.le.s32.totalorder 1, %s9
    %p155 = scmp.lt.s32.totalorder %s9, 7
    %p156 = pnand %p154, %p155
    %p157 = pneg %p156
    // Predicated region
    $region9: #{_lambda_.3} parent=5 // pred_check
      _
    $region10: #{_lambda_.3} parent=5 // pred_check_branch
      %159 = sbr.rel (%p156) target = $region12
    $region11: #{_lambda_.3} parent=5 // pred_region
      %s160 = ssub.s32 %s9, 1
    $region12: #{_lambda_.3} parent=5 // pred_fallthru
      _
    %p161 = scmp.lt.s32.totalorder %s9, 6
    // Predicated region
    $region13: #{_lambda_.3} parent=5 // pred_check
      %p162 = pneg %p161
    $region14: #{_lambda_.3} parent=5 // pred_check_branch
      %164 = sbr.rel (%p162) target = $region16
    $region15: #{_lambda_.3} parent=5 // pred_region
      // Predicated region
      $region17: #{_lambda_.3} parent=15 // pred_check
        %p165 = pneg %p52
      $region18: #{_lambda_.3} parent=15 // pred_check_branch
        %167 = sbr.rel (%p165) target = $region20
      $region19: #{_lambda_.3} parent=15 // pred_region
        %s168 = sadd.s32 %s17, %s18
        %p169 = scmp.lt.s32.totalorder %s16, 5
        %s170 = scalar_select %p169, %s16, 5
        %p171 = scmp.lt.s32.totalorder %s168, 0
        %s172 = scalar_select %p171, %s168, 0
        %s173 = sadd.s32 %s172, %s170
        %s174 = smul.addr %s173, 8
        %s175 = scalar_lea.vmem %s0, %s174
        %s176 = sadd.s32 %s17, %s18
      $region20: #{_lambda_.3} parent=15 // pred_fallthru
        _
      // Predicated region
      $region21: #{_lambda_.3} parent=15 // pred_check
        %p177 = pneg %p82
      $region22: #{_lambda_.3} parent=15 // pred_check_branch
        %179 = sbr.rel (%p177) target = $region24
      $region23: #{_lambda_.3} parent=15 // pred_region
        %s180 = sadd.s32 %s17, %s18
        %p181 = scmp.lt.s32.totalorder %s16, 5
        %s182 = scalar_select %p181, %s16, 5
        %p183 = scmp.lt.s32.totalorder %s180, 0
        %s184 = scalar_select %p183, %s180, 0
        %s185 = sadd.s32 %s184, %s182
        %s186 = smul.addr %s185, 8
        %s187 = scalar_lea.vmem %s1, %s186
        %s188 = sadd.s32 %s17, %s18
      $region24: #{_lambda_.3} parent=15 // pred_fallthru
        _
      // Predicated region
      $region25: #{_lambda_.3} parent=15 // pred_check
        %p189 = pneg %p112
      $region26: #{_lambda_.3} parent=15 // pred_check_branch
        %191 = sbr.rel (%p189) target = $region28
      $region27: #{_lambda_.3} parent=15 // pred_region
        %s192 = sadd.s32 %s17, %s18
        %p193 = scmp.lt.s32.totalorder %s16, 5
        %s194 = scalar_select %p193, %s16, 5
        %p195 = scmp.lt.s32.totalorder %s192, 0
        %s196 = scalar_select %p195, %s192, 0
        %s197 = sadd.s32 %s196, %s194
        %s198 = smul.addr %s197, 4
        %s199 = scalar_lea.vmem %s2, %s198
        %s200 = sadd.s32 %s17, %s18
      $region28: #{_lambda_.3} parent=15 // pred_fallthru
        _
    $region16: #{_lambda_.3} parent=5 // pred_fallthru
      _
    %p201 = scmp.le.s32.totalorder 1, %s9
    %p202 = scmp.lt.s32.totalorder %s9, 7
    %p203 = pnand %p201, %p202
    %p204 = pneg %p203
    // Predicated region
    $region29: #{_lambda_.3} parent=5 // pred_check
      _
    $region30: #{_lambda_.3} parent=5 // pred_check_branch
      %206 = sbr.rel (%p203) target = $region32
    $region31: #{_lambda_.3} parent=5 // pred_region
      %s207 = ssub.s32 %s9, 1
      %s208 = sadd.s32 %s20, %s21
      %p209 = scmp.lt.s32.totalorder %s19, 5
      %s210 = scalar_select %p209, %s19, 5
      %p211 = scmp.lt.s32.totalorder %s208, 0
      %s212 = scalar_select %p211, %s208, 0
      %s213 = sadd.s32 %s212, %s210
      %s214 = smul.addr %s213, 8
      %s215 = scalar_lea.vmem %s0, %s214
      %p216 = pneg %p58
      %p217 = pneg %p55
      %s218 = sadd.s32 %s20, %s21
      %p219 = scmp.lt.s32.totalorder %s19, 5
      %s220 = scalar_select %p219, %s19, 5
      %p221 = scmp.lt.s32.totalorder %s218, 0
      %s222 = scalar_select %p221, %s218, 0
      %s223 = sadd.s32 %s222, %s220
      %s224 = smul.addr %s223, 8
      %s225 = scalar_lea.vmem %s1, %s224
      %p226 = pneg %p88
      %p227 = pneg %p85
      %s228 = sadd.s32 %s20, %s21
      %p229 = scmp.lt.s32.totalorder %s19, 5
      %s230 = scalar_select %p229, %s19, 5
      %p231 = scmp.lt.s32.totalorder %s228, 0
      %s232 = scalar_select %p231, %s228, 0
      %s233 = sadd.s32 %s232, %s230
      %s234 = smul.addr %s233, 4
      %s235 = scalar_lea.vmem %s2, %s234
      %p236 = pneg %p118
      %p237 = pneg %p115
      %p238 = pneg %p146
      %p239 = pneg %p143
      %p240 = scmp.lt.s32.totalorder %s19, 5
      %s241 = scalar_select %p240, %s19, 5
      %p242 = scmp.lt.s32.totalorder %s20, 0
      %s243 = scalar_select %p242, %s20, 0
      %s244 = sadd.s32 %s243, %s241
      %s245 = smul.addr %s244, 8
      %s246 = scalar_lea.vmem %s3, %s245
      %s247 = sadd.s32 %s20, %s21
      %p248 = scmp.lt.s32.totalorder %s19, 5
      %s249 = scalar_select %p248, %s19, 5
      %p250 = scmp.lt.s32.totalorder %s247, 0
      %s251 = scalar_select %p250, %s247, 0
      %s252 = sadd.s32 %s251, %s249
      %s253 = smul.addr %s252, 8
      %s254 = scalar_lea.vmem %s0, %s253
      %s255 = sadd.s32 %s20, %s21
      %s256 = sadd.s32 %s20, %s21
      %p257 = scmp.lt.s32.totalorder %s19, 5
      %s258 = scalar_select %p257, %s19, 5
      %p259 = scmp.lt.s32.totalorder %s256, 0
      %s260 = scalar_select %p259, %s256, 0
      %s261 = sadd.s32 %s260, %s258
      %s262 = smul.addr %s261, 8
      %s263 = scalar_lea.vmem %s1, %s262
      %s264 = sadd.s32 %s20, %s21
      %s265 = sadd.s32 %s20, %s21
      %p266 = scmp.lt.s32.totalorder %s19, 5
      %s267 = scalar_select %p266, %s19, 5
      %p268 = scmp.lt.s32.totalorder %s265, 0
      %s269 = scalar_select %p268, %s265, 0
      %s270 = sadd.s32 %s269, %s267
      %s271 = smul.addr %s270, 4
      %s272 = scalar_lea.vmem %s2, %s271
      %s273 = sadd.s32 %s20, %s21
      %p274 = scmp.lt.s32.totalorder %s19, 5
      %s275 = scalar_select %p274, %s19, 5
      %p276 = scmp.lt.s32.totalorder %s20, 0
      %s277 = scalar_select %p276, %s20, 0
      %s278 = sadd.s32 %s277, %s275
      %s279 = smul.addr %s278, 8
      %s280 = scalar_lea.vmem %s3, %s279
      %p281 = scmp.eq.s32.totalorder %s21, 0
      // Predicated region
      $region33: #{_lambda_.3} parent=31 // pred_check
        %p282 = pneg %p281
      $region34: #{_lambda_.3} parent=31 // pred_check_branch
        %284 = sbr.rel (%p282) target = $region36
      $region35: #{_lambda_.3} parent=31 // pred_region
        %285 = vst [vmem:[#allocation2] sm:$0xff] 0.0
      $region36: #{_lambda_.3} parent=31 // pred_fallthru
        _
      %v286 = vld [vmem:[%s254] sm:$0xff]
      %v287 = vld [vmem:[%s263] sm:$0xff]
      %v288 = vld [vmem:[%s272] sm:$0x7]
      %v289 = vlaneseq
      %v290 = vshrl.u32 %v289, 7
      %v291 = vand.u32 2147483647, %v286
      %v292 = vsub.f32 0.0, %v291
      %v293 = vmul.f32 %v292, 1.442695
      %v294 = vpow.pop %v293
      %v295 = vadd.f32 %v294, 1.0
      %v296 = vlog2.pop %v295
      %v297 = vmul.f32 %v296, 0.6931472
      %v298 = vmax.f32 %v286, 0.0
      %v299 = vadd.f32 %v298, %v297
      %v300 = vsub.f32 %v299, %v286
      %v301 = vmin.f32 %v300, 100.0
      %v302 = vmul.f32 %v287, %v301
      %v303 = vsub.f32 1.0, %v287
      %v304 = vmin.f32 %v299, 100.0
      %v305 = vmul.f32 %v303, %v304
      %v306 = vadd.f32 %v302, %v305
      %v307 = vrcp.pop %v295
      %v308 = vmul.f32 %v295, %v307
      %v309 = vsub.f32 1.0, %v308
      %v310 = vmul.f32 %v307, %v309
      %v311 = vadd.f32 %v307, %v310
      %vm312 = vweird.f32 %v295
      %vm313 = vweird.f32 %v307
      %vm314 = vmor %vm312, %vm313
      %v315 = vsel %vm314, %v307, %v311
      %v316 = vand.u32 2147483647, %v295
      %vm317 = vcmp.eq.f32.partialorder %v316, 8.507059e+37
      %v318 = vand.u32 %v295, 2147483648
      %v319 = vor.u32 1.1754944e-38, %v318
      %v320 = vsel %vm317, %v319, %v315
      %v321 = vmul.f32 1.0, %v320
      %vm322 = vcmp.ge.f32.partialorder %v286, 0.0
      %v323 = vsub.f32 1.0, %v321
      %v324 = vsel %vm322, %v321, %v323
      %vm325 = vcmp.lt.s32.totalorder %v290, 2
      %v326 = vsel %vm325, %v324, %v286
      %v327 = vsub.f32 %v326, %v287
      %v328 = vperm.slane %v288, 0
      %v329 = vperm.slane %v288, 1
      %v330 = vperm.slane %v288, 2
      %vm331 = vcmp.lt.s32.totalorder %v290, 4
      %vm332 = vcmp.eq.s32.totalorder %v290, 4
      %v333 = vsel %vm332, %v328, %v329
      %v334 = vsel %vm331, %v330, %v333
      %v335 = vmul.f32 %v327, %v327
      %v336 = vsel %vm331, %v335, %v306
      %v337 = vld [vmem:[#allocation2] sm:$0xff]
      %v338 = vmul.f32 %v336, %v334
      %v339 = vadd.f32 %v337, %v338
      %340 = vst [vmem:[#allocation2] sm:$0xff] %v339
      // Predicated region
      $region37: #{_lambda_.3} parent=31 // pred_check
        %p341 = pneg %p281
      $region38: #{_lambda_.3} parent=31 // pred_check_branch
        %343 = sbr.rel (%p341) target = $region40
      $region39: #{_lambda_.3} parent=31 // pred_region
        %v344 = vld [vmem:[#allocation2] sm:$0xff]
        %v345 = vsel %vm332, %v344, 0.0
        %346 = vadd.xlane.f32.xlu0 %v345
        %v347 = vpop.xlane.xlu0 %346
        %v348 = vrot.slane %v347, 4
        %v349 = vadd.f32 %v347, %v348
        %v350 = vrot.slane %v349, 2
        %v351 = vadd.f32 %v349, %v350
        %v352 = vrot.slane %v351, 1
        %v353 = vadd.f32 %v351, %v352
        %s354 = vtos %v353
        %vm355 = vcmp.ge.s32.totalorder %v290, 5
        %v356 = vsel %vm355, %v344, 0.0
        %357 = vadd.xlane.f32.xlu0 %v356
        %v358 = vpop.xlane.xlu0 %357
        %v359 = vrot.slane %v358, 4
        %v360 = vadd.f32 %v358, %v359
        %v361 = vrot.slane %v360, 2
        %v362 = vadd.f32 %v360, %v361
        %v363 = vrot.slane %v362, 1
        %v364 = vadd.f32 %v362, %v363
        %s365 = vtos %v364
        %v366 = vsel %vm331, %v344, 0.0
        %367 = vadd.xlane.f32.xlu0 %v366
        %v368 = vpop.xlane.xlu0 %367
        %v369 = vrot.slane %v368, 4
        %v370 = vadd.f32 %v368, %v369
        %v371 = vrot.slane %v370, 2
        %v372 = vadd.f32 %v370, %v371
        %v373 = vrot.slane %v372, 1
        %v374 = vadd.f32 %v372, %v373
        %s375 = vtos %v374
        %v376 = vlaneseq
        %v377 = vand.u32 %v376, 127
        %vm378 = vcmp.eq.s32.totalorder %v290, 0
        %vm379 = vcmp.eq.s32.totalorder %v377, 0
        %vm380 = vmand %vm378, %vm379
        %v381 = vstv %s354
        %v382 = vsel %vm380, %v381, 0.0
        %vm383 = vcmp.eq.s32.totalorder %v377, 1
        %vm384 = vmand %vm378, %vm383
        %v385 = vstv %s365
        %v386 = vsel %vm384, %v385, 0.0
        %v387 = vadd.f32 %v382, %v386
        %vm388 = vcmp.eq.s32.totalorder %v377, 2
        %vm389 = vmand %vm378, %vm388
        %v390 = vstv %s375
        %v391 = vsel %vm389, %v390, 0.0
        %v392 = vadd.f32 %v387, %v391
        %393 = vst [vmem:[%s280] sm:$0xff] %v392
      $region40: #{_lambda_.3} parent=31 // pred_fallthru
        _
      %p394 = scmp.lt.s32.totalorder %s19, 5
      %s395 = scalar_select %p394, %s19, 5
      %p396 = scmp.lt.s32.totalorder %s20, 0
      %s397 = scalar_select %p396, %s20, 0
      %s398 = sadd.s32 %s397, %s395
      %s399 = smul.addr %s398, 8
      %s400 = scalar_lea.vmem %s3, %s399
      // Predicated region
      $region41: #{_lambda_.3} parent=31 // pred_check
        %p401 = pneg %p143
      $region42: #{_lambda_.3} parent=31 // pred_check_branch
        %403 = sbr.rel (%p401) target = $region44
      $region43: #{_lambda_.3} parent=31 // pred_region
        _
      $region44: #{_lambda_.3} parent=31 // pred_fallthru
        _
    $region32: #{_lambda_.3} parent=5 // pred_fallthru
      _
    %p404 = scmp.le.s32.totalorder 2, %s9
    // Predicated region
    $region45: #{_lambda_.3} parent=5 // pred_check
      %p405 = pneg %p404
    $region46: #{_lambda_.3} parent=5 // pred_check_branch
      %407 = sbr.rel (%p405) target = $region48
    $region47: #{_lambda_.3} parent=5 // pred_region
      %s408 = ssub.s32 %s9, 2
      // Predicated region
      $region49: #{_lambda_.3} parent=47 // pred_check
        %p409 = pneg %p149
      $region50: #{_lambda_.3} parent=47 // pred_check_branch
        %411 = sbr.rel (%p409) target = $region52
      $region51: #{_lambda_.3} parent=47 // pred_region
        %p412 = scmp.lt.s32.totalorder %s22, 5
        %s413 = scalar_select %p412, %s22, 5
        %p414 = scmp.lt.s32.totalorder %s23, 0
        %s415 = scalar_select %p414, %s23, 0
        %s416 = sadd.s32 %s415, %s413
        %s417 = smul.addr %s416, 8
        %s418 = scalar_lea.vmem %s3, %s417
      $region52: #{_lambda_.3} parent=47 // pred_fallthru
        _
    $region48: #{_lambda_.3} parent=5 // pred_fallthru
      _
  $region6: #{_lambda_.3} parent=0 // loop_footer
    %s13 = sadd.s32 1, %s9
  $region7: #{_lambda_.3} parent=0 // loop_footer_branch
    %8 = sbr.rel target = $region3
  $region8: #{_lambda_.3} parent=0 // loop_exit
    _

</llo_original>
